<compile_context>
chip_gen: v7x
topology: tpu7x:2x2x1
jax: 0.10.0
libtpu: 0.0.40
codegen_flags: <defaults>
</compile_context>

<pallas_src>
import functools

import numpy as np
import jax
import jax.numpy as jnp
from jax.experimental import pallas as pl
from jax.experimental.pallas import tpu as pltpu

RADIX = 2
_EPS = 1e-5


# -----------------------------------------------------------------------------
# shape helpers
# -----------------------------------------------------------------------------
def _round_up(x, m):
    return ((x + m - 1) // m) * m


def _pick_tile(d, max_tile, gran):
    """Return (padded_dim, tile) with tile | padded_dim, tile multiple of gran."""
    dp = _round_up(d, gran)
    if dp <= max_tile:
        return dp, dp
    dp = _round_up(d, max_tile)
    return dp, max_tile


def _pick_tk(kp, max_tk=1536):
    """Largest multiple-of-128 divisor of kp that does not exceed max_tk."""
    if kp <= max_tk:
        return kp
    best = 128
    d = 256
    while d <= max_tk:
        if kp % d == 0:
            best = d
        d += 128
    return best


# -----------------------------------------------------------------------------
# Pallas kernels: bf16 GEMM with fused BN(+ReLU)(+residual) epilogue
# -----------------------------------------------------------------------------
def _gemm_bn_kernel(a_ref, b_ref, s_ref, t_ref, o_ref, acc_ref, *, relu):
    @pl.when(pl.program_id(2) == 0)
    def _():
        acc_ref[...] = jnp.zeros_like(acc_ref)

    acc_ref[...] += jnp.dot(a_ref[...], b_ref[...],
                            preferred_element_type=jnp.float32)

    @pl.when(pl.program_id(2) == pl.num_programs(2) - 1)
    def _():
        y = acc_ref[...] * s_ref[...] + t_ref[...]
        if relu:
            y = jnp.maximum(y, 0.0)
        o_ref[...] = y.astype(o_ref.dtype)


def _gemm_bn_res_kernel(a_ref, b_ref, s_ref, t_ref, r_ref, o_ref, acc_ref, *,
                        relu):
    @pl.when(pl.program_id(2) == 0)
    def _():
        acc_ref[...] = jnp.zeros_like(acc_ref)

    acc_ref[...] += jnp.dot(a_ref[...], b_ref[...],
                            preferred_element_type=jnp.float32)

    @pl.when(pl.program_id(2) == pl.num_programs(2) - 1)
    def _():
        y = acc_ref[...] * s_ref[...] + t_ref[...] + r_ref[...].astype(jnp.float32)
        if relu:
            y = jnp.maximum(y, 0.0)
        o_ref[...] = y.astype(o_ref.dtype)


@functools.partial(jax.jit, static_argnames=("relu",))
def fused_gemm(a, b, scale, shift, residual=None, *, relu):
    """bf16 out = act((a @ b) * scale + shift [+ residual]).

    a:        (M, K)   activations (cast to bf16 inside).
    b:        (Kp, Np) bf16 weight, pre-padded (Kp, Np multiples of 128; rows
              K..Kp-1 and cols Cout..Np-1 are zero).
    scale:    (1, Np) f32 folded-BN scale (zero on padded channels).
    shift:    (1, Np) f32 folded-BN shift (zero on padded channels).
    residual: optional (M, Np) bf16 added in the epilogue before the ReLU.
    """
    M, K = a.shape
    Kp, Np = b.shape
    assert K <= Kp and Kp % 128 == 0 and Np % 128 == 0

    a = a.astype(jnp.bfloat16)
    Mp, tm = _pick_tile(M, 256, 16)
    tk = _pick_tk(Kp)
    tn = Np if Np <= 256 else (256 if Np % 256 == 0 else 128)

    if (Mp, Kp) != (M, K):
        a = jnp.pad(a, ((0, Mp - M), (0, Kp - K)))

    out_spec = pl.BlockSpec((tm, tn), lambda i, j, k: (i, j))
    in_specs = [pl.BlockSpec((tm, tk), lambda i, j, k: (i, k)),
                pl.BlockSpec((tk, tn), lambda i, j, k: (k, j)),
                pl.BlockSpec((1, tn), lambda i, j, k: (0, j)),
                pl.BlockSpec((1, tn), lambda i, j, k: (0, j))]

    if residual is None:
        kernel = functools.partial(_gemm_bn_kernel, relu=relu)
        args = (a, b, scale, shift)
    else:
        r = residual.astype(jnp.bfloat16)
        if Mp != M:
            r = jnp.pad(r, ((0, Mp - M), (0, 0)))
        kernel = functools.partial(_gemm_bn_res_kernel, relu=relu)
        in_specs = in_specs + [pl.BlockSpec((tm, tn), lambda i, j, k: (i, j))]
        args = (a, b, scale, shift, r)

    out = pl.pallas_call(
        kernel,
        out_shape=jax.ShapeDtypeStruct((Mp, Np), jnp.bfloat16),
        grid_spec=pltpu.PrefetchScalarGridSpec(
            num_scalar_prefetch=0,
            grid=(Mp // tm, Np // tn, Kp // tk),
            in_specs=in_specs,
            out_specs=out_spec,
            scratch_shapes=[pltpu.VMEM((tm, tn), jnp.float32)]),
        compiler_params=pltpu.CompilerParams(
            dimension_semantics=("parallel", "parallel", "arbitrary")),
    )(*args)

    if Mp != M:
        out = out[:M]
    return out


# -----------------------------------------------------------------------------
# conv / pooling wrappers (JAX glue around the fused GEMM kernel)
# -----------------------------------------------------------------------------
@functools.partial(jax.jit, static_argnames=("relu",))
def conv1x1(x, cw, residual=None, *, relu):
    """1x1 conv + folded BN (+ReLU)(+residual) in one fused Pallas GEMM."""
    B, H, W, C = x.shape
    npad = cw["w"].shape[1]
    a = x.reshape(B * H * W, C)
    r = None if residual is None else residual.reshape(B * H * W, npad)
    y = fused_gemm(a, cw["w"], cw["s"], cw["t"], residual=r, relu=relu)
    return y.reshape(B, H, W, npad)


@functools.partial(jax.jit, static_argnames=("stride", "relu"))
def conv3x3(x, cw, *, stride, relu):
    """3x3 conv (padding=1) + folded BN (+ReLU) via bf16 im2col + fused GEMM."""
    # TODO(synk): im2col materializes 9x the activation volume (bf16).
    B, H, W, C = x.shape
    xp = jnp.pad(x, ((0, 0), (1, 1), (1, 1), (0, 0)))
    OH = (H - 1) // stride + 1
    OW = (W - 1) // stride + 1
    cols = [xp[:, kh:kh + (OH - 1) * stride + 1:stride,
               kw:kw + (OW - 1) * stride + 1:stride, :]
            for kh in range(3) for kw in range(3)]
    a = jnp.stack(cols, axis=3).reshape(B * OH * OW, 9 * C)
    y = fused_gemm(a, cw["w"], cw["s"], cw["t"], relu=relu)
    return y.reshape(B, OH, OW, cw["w"].shape[1])


@jax.jit
def maxpool3x3_s2_p1(x):
    B, H, W, C = x.shape
    xp = jnp.pad(x, ((0, 0), (1, 1), (1, 1), (0, 0)), constant_values=-np.inf)
    OH = (H - 1) // 2 + 1
    OW = (W - 1) // 2 + 1
    out = None
    for kh in range(3):
        for kw in range(3):
            v = xp[:, kh:kh + (OH - 1) * 2 + 1:2, kw:kw + (OW - 1) * 2 + 1:2, :]
            out = v if out is None else jnp.maximum(out, v)
    return out


@functools.partial(jax.jit, static_argnames=("stride",))
def avgpool3x3_p1(x, *, stride):
    """AvgPool2d(3, stride, padding=1), count_include_pad=True (divide by 9)."""
    B, H, W, C = x.shape
    xp = jnp.pad(x, ((0, 0), (1, 1), (1, 1), (0, 0)))
    OH = (H - 1) // stride + 1
    OW = (W - 1) // stride + 1
    acc = jnp.zeros((B, OH, OW, C), jnp.float32)
    for kh in range(3):
        for kw in range(3):
            acc = acc + xp[:, kh:kh + (OH - 1) * stride + 1:stride,
                           kw:kw + (OW - 1) * stride + 1:stride, :].astype(jnp.float32)
    return (acc * (1.0 / 9.0)).astype(x.dtype)


@jax.jit
def avgpool2x2(x):
    B, H, W, C = x.shape
    y = x.reshape(B, H // 2, 2, W // 2, 2, C).astype(jnp.float32).mean(axis=(2, 4))
    return y.astype(x.dtype)


# -----------------------------------------------------------------------------
# ResNeSt blocks
# -----------------------------------------------------------------------------
def splat_conv(x, sp):
    """SplAtConv2d(channels, channels, 3, padding=1, radix=2): one fused GEMM
    (group structure zero-masked into the weight) + tiny JAX attention glue."""
    C = sp["channels"]
    B = x.shape[0]
    y = conv3x3(x, sp["conv"], stride=1, relu=True)          # conv + bn0 + relu
    s0 = y[..., :C].astype(jnp.float32)
    s1 = y[..., C:2 * C].astype(jnp.float32)
    gap = (s0 + s1).mean(axis=(1, 2))                        # (B, C)
    g1 = jnp.maximum(gap @ sp["fc1_w"] + sp["fc1_b"], 0.0)   # fc1 + bn1 + relu
    att = g1 @ sp["fc2_w"] + sp["fc2_b"]                     # (B, 2C)
    att = jax.nn.softmax(att.reshape(B, RADIX, C), axis=1)   # rSoftMax
    out = att[:, 0][:, None, None, :] * s0 + att[:, 1][:, None, None, :] * s1
    return out.astype(jnp.bfloat16)                          # (B, H, W, C)


def bottleneck_fwd(x, blk):
    p = blk["params"]
    stride, avd, has_down = blk["stride"], blk["avd"], blk["has_down"]

    out = splat_conv(conv1x1(x, p["conv1"], relu=True), p["splat"])
    if avd:                                                  # avd_first=False
        out = avgpool3x3_p1(out, stride=stride)

    if has_down:
        res = avgpool2x2(x) if stride != 1 else x            # avg_down
        res = conv1x1(res, p["down"], relu=False)            # down conv + bn
    else:
        res = x

    # conv3 + bn3 + residual add + ReLU fused in a single GEMM epilogue.
    return conv1x1(out, p["conv3"], residual=res, relu=True)


def resnest_forward(x_nchw, params):
    x = jnp.transpose(x_nchw, (0, 2, 3, 1)).astype(jnp.bfloat16)   # NCHW -> NHWC

    # deep stem: conv(3->32,s2) bn relu, conv(32->32) bn relu, conv(32->64) bn relu
    for cw, s in zip(params["stem"], (2, 1, 1)):
        x = conv3x3(x, cw, stride=s, relu=True)
    x = maxpool3x3_s2_p1(x)

    for blocks in params["layers"]:
        for blk in blocks:
            x = bottleneck_fwd(x, blk)

    x = x.astype(jnp.float32).mean(axis=(1, 2))              # GlobalAvgPool2d
    # resnest50.fc Linear(2048,1000) -> wrapper ReLU1 -> wrapper fc1 Linear(1000,2)
    # (M == batch == 2 : plain jnp.dot, the MXU gains nothing here)
    x = jnp.maximum(x @ params["fc"]["w"] + params["fc"]["b"], 0.0)
    return x @ params["head_fc"]["w"] + params["head_fc"]["b"]


# -----------------------------------------------------------------------------
# Deterministic synthetic parameters (resnest50 shapes), pre-transformed for TPU
# -----------------------------------------------------------------------------
_rng = np.random.default_rng(0)


def _conv_w(cout, cin, k):
    fan_in = cin * k * k
    return _rng.normal(0.0, np.sqrt(2.0 / fan_in),
                       size=(cout, cin, k, k)).astype(np.float32)


def _bn(c, gamma_scale=1.0):
    return dict(
        gamma=(gamma_scale * (1.0 + 0.1 * _rng.standard_normal(c))).astype(np.float32),
        beta=(0.1 * _rng.standard_normal(c)).astype(np.float32),
        mean=(0.1 * _rng.standard_normal(c)).astype(np.float32),
        var=(1.0 + 0.1 * _rng.random(c)).astype(np.float32))


def _fold_bn(bn):
    s = bn["gamma"] / np.sqrt(bn["var"] + _EPS)
    return s.astype(np.float32), (bn["beta"] - bn["mean"] * s).astype(np.float32)


def _prep_gemm_weight(w_oihw, cin_pad, scale, shift):
    """PyTorch (Cout,Cin,kh,kw) conv weight + folded BN -> pre-padded GEMM
    operands: w (Kp, Np) bf16 (K laid out tap-major * cin_pad, matching the
    im2col column order) and scale/shift (1, Np) f32 (zero on padded cols)."""
    cout, cin, kh, kw = w_oihw.shape
    assert cin <= cin_pad
    n_pad = _round_up(cout, 128)
    k = kh * kw * cin_pad
    k_pad = _round_up(k, 128)
    wf = np.zeros((kh, kw, cin_pad, cout), np.float32)
    wf[:, :, :cin, :] = np.transpose(w_oihw, (2, 3, 1, 0))
    wp = np.zeros((k_pad, n_pad), np.float32)
    wp[:k, :cout] = wf.reshape(k, cout)
    sp = np.zeros((1, n_pad), np.float32)
    tp = np.zeros((1, n_pad), np.float32)
    sp[0, :cout] = scale
    tp[0, :cout] = shift
    return dict(w=jnp.asarray(wp, jnp.bfloat16),
                s=jnp.asarray(sp), t=jnp.asarray(tp))


def _prep_conv_bn(cout, cin, k, cin_pad, gamma_scale=1.0):
    s, t = _fold_bn(_bn(cout, gamma_scale))
    return _prep_gemm_weight(_conv_w(cout, cin, k), cin_pad, s, t)


def _prep_splat(planes, cin_pad):
    """SplAtConv2d params: the radix-2 grouped 3x3 conv is stored as a single
    dense (Kp, Np) weight with the group structure as zero blocks, so both
    radix branches come from one fused GEMM; fc1+bn1 / fc2 are pre-folded."""
    c = planes
    cin_g = planes // RADIX
    wg = _conv_w(RADIX * c, cin_g, 3)                     # PyTorch grouped layout
    wd = np.zeros((RADIX * c, planes, 3, 3), np.float32)  # dense, group-masked
    for g in range(RADIX):
        wd[g * c:(g + 1) * c, g * cin_g:(g + 1) * cin_g] = wg[g * c:(g + 1) * c]
    s0, t0 = _fold_bn(_bn(RADIX * c))
    conv = _prep_gemm_weight(wd, cin_pad, s0, t0)

    inter = max(RADIX * c // 4, 32)
    fc1_w = _conv_w(inter, c, 1).reshape(inter, c)
    fc1_b = _rng.uniform(-0.05, 0.05, (inter,)).astype(np.float32)
    s1, t1 = _fold_bn(_bn(inter))
    fc2_w = _conv_w(RADIX * c, inter, 1).reshape(RADIX * c, inter)
    fc2_b = _rng.uniform(-0.05, 0.05, (RADIX * c,)).astype(np.float32)
    return dict(conv=conv, channels=c,
                fc1_w=jnp.asarray((fc1_w * s1[:, None]).T),   # bn1 folded in
                fc1_b=jnp.asarray(fc1_b * s1 + t1),
                fc2_w=jnp.asarray(fc2_w.T),
                fc2_b=jnp.asarray(fc2_b))


def _bottleneck_params(inplanes, planes, has_down):
    in_pad = _round_up(inplanes, 128)
    p = dict(conv1=_prep_conv_bn(planes, inplanes, 1, in_pad),
             splat=_prep_splat(planes, _round_up(planes, 128)),
             conv3=_prep_conv_bn(planes * 4, planes, 1, planes, gamma_scale=0.2))
    if has_down:
        p["down"] = _prep_conv_bn(planes * 4, inplanes, 1, in_pad)
    return p


def _linear(cin, cout):
    bound = 1.0 / np.sqrt(cin)
    return dict(w=jnp.asarray(_rng.uniform(-bound, bound, (cout, cin)).T
                              .astype(np.float32)),           # pre-transposed (K,N)
                b=jnp.asarray(_rng.uniform(-bound, bound, (cout,)).astype(np.float32)))


def make_params():
    params = {"stem": [_prep_conv_bn(32, 3, 3, 3),
                       _prep_conv_bn(32, 32, 3, 128),
                       _prep_conv_bn(64, 32, 3, 128)]}

    layer_cfg = [(64, 3, 1), (128, 4, 2), (256, 6, 2), (512, 3, 2)]
    inplanes = 64
    layers = []
    for li, (planes, nblocks, stride) in enumerate(layer_cfg):
        blocks = []
        for bi in range(nblocks):
            s = stride if bi == 0 else 1
            is_first = (bi == 0 and li != 0)      # layer1 is built with is_first=False
            avd = (s > 1) or is_first             # avd=True globally in resnest50
            has_down = (bi == 0) and (s != 1 or inplanes != planes * 4)
            blocks.append(dict(params=_bottleneck_params(inplanes, planes, has_down),
                               stride=s, avd=avd, has_down=has_down))
            inplanes = planes * 4
        layers.append(blocks)
    params["layers"] = layers
    params["fc"] = _linear(2048, 1000)        # resnest50 classifier
    params["head_fc"] = _linear(1000, 2)      # wrapper fc1
    return params


# -----------------------------------------------------------------------------
if __name__ == "__main__":
    key = jax.random.PRNGKey(0)
    x = jax.random.normal(key, (2, 3, 64, 64), dtype=jnp.float32)   # NCHW input
    params = make_params()
    out = resnest_forward(x, params)
    out = jax.block_until_ready(out)
    assert out.shape == (2, 2), out.shape
    print("KERNEL_OK")
</pallas_src>

<mosaic_0001>
module attributes {stable_mosaic.version = 11 : i64} {
  func.func @_gemm_bn_kernel(%arg0: i32, %arg1: i32, %arg2: i32, %arg3: memref<256x128xbf16, #tpu.memory_space<vmem>>, %arg4: memref<128x128xbf16, #tpu.memory_space<vmem>>, %arg5: memref<1x128xf32, #tpu.memory_space<vmem>>, %arg6: memref<1x128xf32, #tpu.memory_space<vmem>>, %arg7: memref<256x128xbf16, #tpu.memory_space<vmem>>, %arg8: memref<256x128xf32, #tpu.memory_space<vmem>>) attributes {dimension_semantics = [#tpu.dimension_semantics<parallel>, #tpu.dimension_semantics<parallel>, #tpu.dimension_semantics<arbitrary>], iteration_bounds = array<i64: 8, 1, 1>, scalar_prefetch = 0 : i64, scratch_operands = 1 : i64, tpu.core_type = #tpu.core_type<tc>, window_params = [{transform_indices = @transform_0, window_bounds = array<i64: 256, 128>}, {transform_indices = @transform_1, window_bounds = array<i64: 128, 128>}, {transform_indices = @transform_2, window_bounds = array<i64: 1, 128>}, {transform_indices = @transform_3, window_bounds = array<i64: 1, 128>}, {transform_indices = @transform_4, window_bounds = array<i64: 256, 128>}]} {
    %c0_i32 = arith.constant 0 : i32
    %0 = arith.cmpi eq, %arg2, %c0_i32 : i32
    %1 = arith.extui %0 : i1 to i32
    %c0_i32_0 = arith.constant 0 : i32
    %2 = arith.cmpi ne, %1, %c0_i32_0 : i32
    scf.if %2 {
      %cst_10 = arith.constant 0.000000e+00 : f32
      %12 = vector.broadcast %cst_10 : f32 to vector<256x128xf32>
      %c0_11 = arith.constant 0 : index
      %c0_12 = arith.constant 0 : index
      %13 = vector.load %arg8[%c0_11, %c0_12] : memref<256x128xf32, #tpu.memory_space<vmem>>, vector<256x128xf32>
      tpu.vector_store %arg8[%c0_11, %c0_12], %12 {strides = array<i32>} : memref<256x128xf32, #tpu.memory_space<vmem>>, vector<256x128xf32>,
    } else {
    }
    %c0 = arith.constant 0 : index
    %c0_1 = arith.constant 0 : index
    %3 = vector.load %arg8[%c0, %c0_1] : memref<256x128xf32, #tpu.memory_space<vmem>>, vector<256x128xf32>
    %c0_2 = arith.constant 0 : index
    %c0_3 = arith.constant 0 : index
    %4 = vector.load %arg3[%c0_2, %c0_3] : memref<256x128xbf16, #tpu.memory_space<vmem>>, vector<256x128xbf16>
    %c0_4 = arith.constant 0 : index
    %c0_5 = arith.constant 0 : index
    %5 = vector.load %arg4[%c0_4, %c0_5] : memref<128x128xbf16, #tpu.memory_space<vmem>>, vector<128x128xbf16>
    %cst = arith.constant dense<0.000000e+00> : vector<256x128xf32>
    %6 = tpu.matmul %4, %5, %cst {dimension_numbers = #tpu.dot_dimension_numbers<[1], [0], [0], [1], [0, 0, 1, 1], [], []>} : vector<256x128xbf16>, vector<128x128xbf16>, vector<256x128xf32> -> vector<256x128xf32>
    %7 = arith.addf %3, %6 : vector<256x128xf32>
    %c0_6 = arith.constant 0 : index
    %c0_7 = arith.constant 0 : index
    %8 = vector.load %arg8[%c0_6, %c0_7] : memref<256x128xf32, #tpu.memory_space<vmem>>, vector<256x128xf32>
    tpu.vector_store %arg8[%c0_6, %c0_7], %7 {strides = array<i32>} : memref<256x128xf32, #tpu.memory_space<vmem>>, vector<256x128xf32>,
    %c0_i32_8 = arith.constant 0 : i32
    %9 = arith.cmpi eq, %arg2, %c0_i32_8 : i32
    %10 = arith.extui %9 : i1 to i32
    %c0_i32_9 = arith.constant 0 : i32
    %11 = arith.cmpi ne, %10, %c0_i32_9 : i32
    scf.if %11 {
      %c0_10 = arith.constant 0 : index
      %c0_11 = arith.constant 0 : index
      %12 = vector.load %arg8[%c0_10, %c0_11] : memref<256x128xf32, #tpu.memory_space<vmem>>, vector<256x128xf32>
      %c0_12 = arith.constant 0 : index
      %c0_13 = arith.constant 0 : index
      %13 = vector.load %arg5[%c0_12, %c0_13] : memref<1x128xf32, #tpu.memory_space<vmem>>, vector<1x128xf32>
      %14 = vector.broadcast %13 : vector<1x128xf32> to vector<256x128xf32>
      %15 = arith.mulf %12, %14 : vector<256x128xf32>
      %c0_14 = arith.constant 0 : index
      %c0_15 = arith.constant 0 : index
      %16 = vector.load %arg6[%c0_14, %c0_15] : memref<1x128xf32, #tpu.memory_space<vmem>>, vector<1x128xf32>
      %17 = vector.broadcast %16 : vector<1x128xf32> to vector<256x128xf32>
      %18 = arith.addf %15, %17 : vector<256x128xf32>
      %cst_16 = arith.constant 0.000000e+00 : f32
      %19 = vector.broadcast %cst_16 : f32 to vector<256x128xf32>
      %20 = arith.maximumf %18, %19 : vector<256x128xf32>
      %21 = arith.truncf %20 : vector<256x128xf32> to vector<256x128xbf16>
      %c0_17 = arith.constant 0 : index
      %c0_18 = arith.constant 0 : index
      %22 = vector.load %arg7[%c0_17, %c0_18] : memref<256x128xbf16, #tpu.memory_space<vmem>>, vector<256x128xbf16>
      tpu.vector_store %arg7[%c0_17, %c0_18], %21 {strides = array<i32>} : memref<256x128xbf16, #tpu.memory_space<vmem>>, vector<256x128xbf16>,
    } else {
    }
    return
  }
  func.func @transform_0(%arg0: i32, %arg1: i32, %arg2: i32) -> (i32, i32) {
    %c0_i32 = arith.constant 0 : i32
    return %arg0, %arg2 : i32, i32
  }
  func.func @transform_1(%arg0: i32, %arg1: i32, %arg2: i32) -> (i32, i32) {
    %c0_i32 = arith.constant 0 : i32
    return %arg2, %arg1 : i32, i32
  }
  func.func @transform_2(%arg0: i32, %arg1: i32, %arg2: i32) -> (i32, i32) {
    %c0_i32 = arith.constant 0 : i32
    %c0_i32_0 = arith.constant 0 : i32
    return %c0_i32, %arg1 : i32, i32
  }
  func.func @transform_3(%arg0: i32, %arg1: i32, %arg2: i32) -> (i32, i32) {
    %c0_i32 = arith.constant 0 : i32
    %c0_i32_0 = arith.constant 0 : i32
    return %c0_i32, %arg1 : i32, i32
  }
  func.func @transform_4(%arg0: i32, %arg1: i32, %arg2: i32) -> (i32, i32) {
    %c0_i32 = arith.constant 0 : i32
    return %arg0, %arg1 : i32, i32
  }
}

</mosaic_0001>

<llo_original>
// kernel: fused_gemm.1
$region0: #{fused_gemm.1}
  #allocation0 [shape = 'u32[]', space=smem, size = 0x4, offset = 0x4, fixed_abs, tag = 'smem constant byte address 0x4 - core index']
  #allocation1 [shape = 'u32[144,128]{1,0:T(1,128)}', space=vmem, size = 0x12000, scoped, tag = 'internal scratch']
  #allocation2 [shape = 'f32[256,128]{1,0:T(8,128)}', space=vmem, size = 0x20000, scoped, tag = 'scratch operand']
  %s0 = inlined_call_operand.vmem [shape: bf16[2048,128], index: 0, kind: input, shape index: {}]
  %s1 = inlined_call_operand.vmem [shape: bf16[128,128], index: 1, kind: input, shape index: {}]
  %s2 = inlined_call_operand.vmem [shape: f32[1,128], index: 2, kind: input, shape index: {}]
  %s3 = inlined_call_operand.vmem [shape: f32[1,128], index: 3, kind: input, shape index: {}]
  %s4 = inlined_call_operand.hbm [shape: bf16[2048,128], index: 4, kind: output, shape index: {}]
  %s5 = sld [smem:[#allocation0]]
  $region57: #{fused_gemm.1} parent=0
    _
  %s7 = ssub.s32 1, %s5
  %s8 = scalar_select 0, %s7, %s5
  $region1: #{fused_gemm.1} parent=0
    #allocation3 [shape = 'u8[131072]{0}', space=vmem, size = 0x20000, scoped, tag = 'output window, operand 0']
    #allocation4 [shape = 's32[2]{0}', space=sflag, size = 0x8, scoped, tag = 'scoped memory for fused_gemm.1']
    %9 = vsyncpa [#allocation4], 0
    %s10 = scalar_lea.sflag [#allocation4], 1
    %11 = vsyncpa %s10, 0
    loop: start=0, step=1, limit=10
    $region2: #{fused_gemm.1} parent=1 // loop_pre_header
      _
    $region3: #{fused_gemm.1} parent=1 // loop_header
      %s13 = sphi 0, %s17
      %p14 = scmp.ge.s32.totalorder %s13, 10
      %s20 = sphi 0, %s39
      %s21 = sphi 0, %s35
      %s22 = sphi 0, %s31
      %s23 = sphi 0, %s20
      %s24 = sphi 0, %s21
      %s25 = sphi 0, %s22
      %s26 = sphi 0, %s23
      %s27 = sphi 0, %s24
      %s28 = sphi 0, %s25
      %s44 = sphi 0, %s46
      %s47 = sphi 0, %s44
      %s48 = sphi 0, %s47
      %s64 = sphi 0, %s48
      %s72 = sphi 0, %s74
      %s75 = sphi 0, %s72
      %s76 = sphi 0, %s75
      %s92 = sphi 0, %s76
      %s98 = sphi 0, %s100
      %s101 = sphi 0, %s98
      %s102 = sphi 0, %s101
      %s118 = sphi 0, %s102
      %s124 = sphi 0, %s126
      %s127 = sphi 0, %s124
      %s128 = sphi 0, %s127
      %s144 = sphi 0, %s128
      %s152 = sphi 0, %s154
      %s155 = sphi 0, %s152
      %s156 = sphi 0, %s155
      %s172 = sphi 0, %s156
    $region4: #{fused_gemm.1} parent=1 // loop_header_branch
      %16 = sbr.rel (%p14) target = $region8
    $region5: #{fused_gemm.1} parent=1 // loop_body
      %s18 = ssub.s32 %s13, 1
      %s19 = ssub.s32 %s13, 2
      %s29 = sadd.s32 1, %s22
      %p30 = scmp.ge.s32.totalorder %s29, 1
      %s31 = scalar_select %p30, 0, %s29
      %s32 = sadd.s32 1, %s21
      %s33 = scalar_select %p30, %s32, %s21
      %p34 = scmp.ge.s32.totalorder %s33, 1
      %s35 = scalar_select %p34, 0, %s33
      %s36 = sadd.s32 1, %s20
      %s37 = scalar_select %p34, %s36, %s20
      %p38 = scmp.ge.s32.totalorder %s37, 8
      %s39 = scalar_select %p38, 0, %s37
      %s40 = ssub.s32 %s20, %s39
      %s41 = ssub.s32 %s22, %s31
      %s42 = sor.u32 %s40, %s41
      %p43 = scmp.eq.s32.totalorder %s42, 0
      %s45 = sadd.s32 %s44, 1
      %s46 = scalar_select %p43, %s44, %s45
      %p49 = pneg %p43
      %p50 = scmp.eq.s32.totalorder %s13, 7
      %p51 = por %p49, %p50
      %p52 = scmp.ne.s32.totalorder %s44, %s47
      %p53 = scmp.eq.s32.totalorder %s13, 0
      %p54 = por %p52, %p53
      %p55 = scmp.ne.s32.totalorder %s44, %s47
      %p56 = scmp.eq.s32.totalorder %s18, 7
      %p57 = por %p55, %p56
      %p58 = scmp.ne.s32.totalorder %s47, %s48
      %p59 = scmp.eq.s32.totalorder %s18, 0
      %p60 = por %p58, %p59
      %p61 = scmp.ne.s32.totalorder %s47, %s48
      %p62 = scmp.eq.s32.totalorder %s19, 7
      %p63 = por %p61, %p62
      %p65 = scmp.ne.s32.totalorder %s48, %s64
      %p66 = scmp.eq.s32.totalorder %s19, 0
      %p67 = por %p65, %p66
      %s68 = ssub.s32 %s22, %s31
      %s69 = ssub.s32 %s21, %s35
      %s70 = sor.u32 %s68, %s69
      %p71 = scmp.eq.s32.totalorder %s70, 0
      %s73 = sadd.s32 %s72, 1
      %s74 = scalar_select %p71, %s72, %s73
      %p77 = pneg %p71
      %p78 = scmp.eq.s32.totalorder %s13, 7
      %p79 = por %p77, %p78
      %p80 = scmp.ne.s32.totalorder %s72, %s75
      %p81 = scmp.eq.s32.totalorder %s13, 0
      %p82 = por %p80, %p81
      %p83 = scmp.ne.s32.totalorder %s72, %s75
      %p84 = scmp.eq.s32.totalorder %s18, 7
      %p85 = por %p83, %p84
      %p86 = scmp.ne.s32.totalorder %s75, %s76
      %p87 = scmp.eq.s32.totalorder %s18, 0
      %p88 = por %p86, %p87
      %p89 = scmp.ne.s32.totalorder %s75, %s76
      %p90 = scmp.eq.s32.totalorder %s19, 7
      %p91 = por %p89, %p90
      %p93 = scmp.ne.s32.totalorder %s76, %s92
      %p94 = scmp.eq.s32.totalorder %s19, 0
      %p95 = por %p93, %p94
      %s96 = ssub.s32 %s21, %s35
      %p97 = scmp.eq.s32.totalorder %s96, 0
      %s99 = sadd.s32 %s98, 1
      %s100 = scalar_select %p97, %s98, %s99
      %p103 = pneg %p97
      %p104 = scmp.eq.s32.totalorder %s13, 7
      %p105 = por %p103, %p104
      %p106 = scmp.ne.s32.totalorder %s98, %s101
      %p107 = scmp.eq.s32.totalorder %s13, 0
      %p108 = por %p106, %p107
      %p109 = scmp.ne.s32.totalorder %s98, %s101
      %p110 = scmp.eq.s32.totalorder %s18, 7
      %p111 = por %p109, %p110
      %p112 = scmp.ne.s32.totalorder %s101, %s102
      %p113 = scmp.eq.s32.totalorder %s18, 0
      %p114 = por %p112, %p113
      %p115 = scmp.ne.s32.totalorder %s101, %s102
      %p116 = scmp.eq.s32.totalorder %s19, 7
      %p117 = por %p115, %p116
      %p119 = scmp.ne.s32.totalorder %s102, %s118
      %p120 = scmp.eq.s32.totalorder %s19, 0
      %p121 = por %p119, %p120
      %s122 = ssub.s32 %s21, %s35
      %p123 = scmp.eq.s32.totalorder %s122, 0
      %s125 = sadd.s32 %s124, 1
      %s126 = scalar_select %p123, %s124, %s125
      %p129 = pneg %p123
      %p130 = scmp.eq.s32.totalorder %s13, 7
      %p131 = por %p129, %p130
      %p132 = scmp.ne.s32.totalorder %s124, %s127
      %p133 = scmp.eq.s32.totalorder %s13, 0
      %p134 = por %p132, %p133
      %p135 = scmp.ne.s32.totalorder %s124, %s127
      %p136 = scmp.eq.s32.totalorder %s18, 7
      %p137 = por %p135, %p136
      %p138 = scmp.ne.s32.totalorder %s127, %s128
      %p139 = scmp.eq.s32.totalorder %s18, 0
      %p140 = por %p138, %p139
      %p141 = scmp.ne.s32.totalorder %s127, %s128
      %p142 = scmp.eq.s32.totalorder %s19, 7
      %p143 = por %p141, %p142
      %p145 = scmp.ne.s32.totalorder %s128, %s144
      %p146 = scmp.eq.s32.totalorder %s19, 0
      %p147 = por %p145, %p146
      %s148 = ssub.s32 %s20, %s39
      %s149 = ssub.s32 %s21, %s35
      %s150 = sor.u32 %s148, %s149
      %p151 = scmp.eq.s32.totalorder %s150, 0
      %s153 = sadd.s32 %s152, 1
      %s154 = scalar_select %p151, %s152, %s153
      %p157 = pneg %p151
      %p158 = scmp.eq.s32.totalorder %s13, 7
      %p159 = por %p157, %p158
      %p160 = scmp.ne.s32.totalorder %s152, %s155
      %p161 = scmp.eq.s32.totalorder %s13, 0
      %p162 = por %p160, %p161
      %p163 = scmp.ne.s32.totalorder %s152, %s155
      %p164 = scmp.eq.s32.totalorder %s18, 7
      %p165 = por %p163, %p164
      %p166 = scmp.ne.s32.totalorder %s155, %s156
      %p167 = scmp.eq.s32.totalorder %s18, 0
      %p168 = por %p166, %p167
      %p169 = scmp.ne.s32.totalorder %s155, %s156
      %p170 = scmp.eq.s32.totalorder %s19, 7
      %p171 = por %p169, %p170
      %p173 = scmp.ne.s32.totalorder %s156, %s172
      %p174 = scmp.eq.s32.totalorder %s19, 0
      %p175 = por %p173, %p174
      %p176 = scmp.le.s32.totalorder 1, %s13
      %p177 = scmp.lt.s32.totalorder %s13, 9
      %p178 = pnand %p176, %p177
      %p179 = pneg %p178
      // Predicated region
      $region9: #{fused_gemm.1} parent=5 // pred_check
        _
      $region10: #{fused_gemm.1} parent=5 // pred_check_branch
        %181 = sbr.rel (%p178) target = $region12
      $region11: #{fused_gemm.1} parent=5 // pred_region
        %s182 = ssub.s32 %s13, 1
        // Predicated region
        $region13: #{fused_gemm.1} parent=11 // pred_check
          %p183 = pneg %p88
        $region14: #{fused_gemm.1} parent=11 // pred_check_branch
          %185 = sbr.rel (%p183) target = $region16
        $region15: #{fused_gemm.1} parent=11 // pred_region
          %s186 = smul.u32 16, %s25
          %p187 = scmp.lt.s32.totalorder %s186, 15
          %s188 = scalar_select %p187, %s186, 15
          %p189 = scmp.lt.s32.totalorder %s24, 0
          %s190 = scalar_select %p189, %s24, 0
          %s191 = sadd.s32 %s190, %s188
          %s192 = smul.addr %s191, 4
          %s193 = scalar_lea.vmem %s1, %s192
          %s194 = smul.u32 16, %s25
        $region16: #{fused_gemm.1} parent=11 // pred_fallthru
          _
        // Predicated region
        $region17: #{fused_gemm.1} parent=11 // pred_check
          %p195 = pneg %p114
        $region18: #{fused_gemm.1} parent=11 // pred_check_branch
          %197 = sbr.rel (%p195) target = $region20
        $region19: #{fused_gemm.1} parent=11 // pred_region
          %p198 = scmp.lt.s32.totalorder %s24, 0
          %s199 = scalar_select %p198, %s24, 0
          %s200 = scalar_lea.vmem %s2, %s199
        $region20: #{fused_gemm.1} parent=11 // pred_fallthru
          _
        // Predicated region
        $region21: #{fused_gemm.1} parent=11 // pred_check
          %p201 = pneg %p140
        $region22: #{fused_gemm.1} parent=11 // pred_check_branch
          %203 = sbr.rel (%p201) target = $region24
        $region23: #{fused_gemm.1} parent=11 // pred_region
          %p204 = scmp.lt.s32.totalorder %s24, 0
          %s205 = scalar_select %p204, %s24, 0
          %s206 = scalar_lea.vmem %s3, %s205
        $region24: #{fused_gemm.1} parent=11 // pred_fallthru
          _
      $region12: #{fused_gemm.1} parent=5 // pred_fallthru
        _
      %p207 = scmp.lt.s32.totalorder %s13, 8
      // Predicated region
      $region25: #{fused_gemm.1} parent=5 // pred_check
        %p208 = pneg %p207
      $region26: #{fused_gemm.1} parent=5 // pred_check_branch
        %210 = sbr.rel (%p208) target = $region28
      $region27: #{fused_gemm.1} parent=5 // pred_region
        // Predicated region
        $region29: #{fused_gemm.1} parent=27 // pred_check
          %p211 = pneg %p54
        $region30: #{fused_gemm.1} parent=27 // pred_check_branch
          %213 = sbr.rel (%p211) target = $region32
        $region31: #{fused_gemm.1} parent=27 // pred_region
          %s214 = smul.u32 32, %s20
          %p215 = scmp.lt.s32.totalorder %s214, 255
          %s216 = scalar_select %p215, %s214, 255
          %p217 = scmp.lt.s32.totalorder %s22, 0
          %s218 = scalar_select %p217, %s22, 0
          %s219 = sadd.s32 %s218, %s216
          %s220 = smul.addr %s219, 4
          %s221 = scalar_lea.vmem %s0, %s220
          %s222 = smul.u32 32, %s20
        $region32: #{fused_gemm.1} parent=27 // pred_fallthru
          _
      $region28: #{fused_gemm.1} parent=5 // pred_fallthru
        _
      %p223 = scmp.le.s32.totalorder 1, %s13
      %p224 = scmp.lt.s32.totalorder %s13, 9
      %p225 = pnand %p223, %p224
      %p226 = pneg %p225
      // Predicated region
      $region33: #{fused_gemm.1} parent=5 // pred_check
        _
      $region34: #{fused_gemm.1} parent=5 // pred_check_branch
        %228 = sbr.rel (%p225) target = $region36
      $region35: #{fused_gemm.1} parent=5 // pred_region
        %s229 = ssub.s32 %s13, 1
        %s230 = smul.u32 32, %s23
        %p231 = scmp.lt.s32.totalorder %s230, 255
        %s232 = scalar_select %p231, %s230, 255
        %p233 = scmp.lt.s32.totalorder %s25, 0
        %s234 = scalar_select %p233, %s25, 0
        %s235 = sadd.s32 %s234, %s232
        %s236 = smul.addr %s235, 4
        %s237 = scalar_lea.vmem %s0, %s236
        %p238 = pneg %p60
        %p239 = pneg %p57
        %s240 = smul.u32 16, %s25
        %p241 = scmp.lt.s32.totalorder %s240, 15
        %s242 = scalar_select %p241, %s240, 15
        %p243 = scmp.lt.s32.totalorder %s24, 0
        %s244 = scalar_select %p243, %s24, 0
        %s245 = sadd.s32 %s244, %s242
        %s246 = smul.addr %s245, 4
        %s247 = scalar_lea.vmem %s1, %s246
        %p248 = pneg %p88
        %p249 = pneg %p85
        %p250 = scmp.lt.s32.totalorder %s24, 0
        %s251 = scalar_select %p250, %s24, 0
        %s252 = scalar_lea.vmem %s2, %s251
        %p253 = pneg %p114
        %p254 = pneg %p111
        %p255 = scmp.lt.s32.totalorder %s24, 0
        %s256 = scalar_select %p255, %s24, 0
        %s257 = scalar_lea.vmem %s3, %s256
        %p258 = pneg %p140
        %p259 = pneg %p137
        %p260 = pneg %p168
        %p261 = pneg %p165
        %s262 = sand.u32 %s155, 1
        %s263 = scalar_lea.sflag [#allocation4], %s262
        %s264 = sand.u32 %s155, 1
        %s265 = smul.addr %s264, 128
        %s266 = scalar_lea.vmem [#allocation3], %s265
        %s267 = smul.u32 32, %s23
        %p268 = scmp.lt.s32.totalorder %s267, 255
        %s269 = scalar_select %p268, %s267, 255
        %p270 = scmp.lt.s32.totalorder %s25, 0
        %s271 = scalar_select %p270, %s25, 0
        %s272 = sadd.s32 %s271, %s269
        %s273 = smul.addr %s272, 4
        %s274 = scalar_lea.vmem %s0, %s273
        %s275 = smul.u32 32, %s23
        %s276 = smul.u32 16, %s25
        %p277 = scmp.lt.s32.totalorder %s276, 15
        %s278 = scalar_select %p277, %s276, 15
        %p279 = scmp.lt.s32.totalorder %s24, 0
        %s280 = scalar_select %p279, %s24, 0
        %s281 = sadd.s32 %s280, %s278
        %s282 = smul.addr %s281, 4
        %s283 = scalar_lea.vmem %s1, %s282
        %s284 = smul.u32 16, %s25
        %p285 = scmp.lt.s32.totalorder %s24, 0
        %s286 = scalar_select %p285, %s24, 0
        %s287 = scalar_lea.vmem %s2, %s286
        %p288 = scmp.lt.s32.totalorder %s24, 0
        %s289 = scalar_select %p288, %s24, 0
        %s290 = scalar_lea.vmem %s3, %s289
        %s291 = smul.u32 32, %s23
        %p293 = scmp.eq.s32.totalorder %s25, 0
        // Predicated region
        $region37: #{fused_gemm.1} parent=35 // pred_check
          %p294 = pneg %p293
        $region38: #{fused_gemm.1} parent=35 // pred_check_branch
          %296 = sbr.rel (%p294) target = $region40
        $region39: #{fused_gemm.1} parent=35 // pred_region
          %297 = vst [vmem:[#allocation2] sm:$0xff] 0.0
          %298 = vst [vmem:[#allocation2 + $0x8] sm:$0xff] 0.0
          %299 = vst [vmem:[#allocation2 + $0x10] sm:$0xff] 0.0
          %300 = vst [vmem:[#allocation2 + $0x18] sm:$0xff] 0.0
          %301 = vst [vmem:[#allocation2 + $0x20] sm:$0xff] 0.0
          %302 = vst [vmem:[#allocation2 + $0x28] sm:$0xff] 0.0
          %303 = vst [vmem:[#allocation2 + $0x30] sm:$0xff] 0.0
          %304 = vst [vmem:[#allocation2 + $0x38] sm:$0xff] 0.0
          %305 = vst [vmem:[#allocation2 + $0x40] sm:$0xff] 0.0
          %306 = vst [vmem:[#allocation2 + $0x48] sm:$0xff] 0.0
          %307 = vst [vmem:[#allocation2 + $0x50] sm:$0xff] 0.0
          %308 = vst [vmem:[#allocation2 + $0x58] sm:$0xff] 0.0
          %309 = vst [vmem:[#allocation2 + $0x60] sm:$0xff] 0.0
          %310 = vst [vmem:[#allocation2 + $0x68] sm:$0xff] 0.0
          %311 = vst [vmem:[#allocation2 + $0x70] sm:$0xff] 0.0
          %312 = vst [vmem:[#allocation2 + $0x78] sm:$0xff] 0.0
          %313 = vst [vmem:[#allocation2 + $0x80] sm:$0xff] 0.0
          %314 = vst [vmem:[#allocation2 + $0x88] sm:$0xff] 0.0
          %315 = vst [vmem:[#allocation2 + $0x90] sm:$0xff] 0.0
          %316 = vst [vmem:[#allocation2 + $0x98] sm:$0xff] 0.0
          %317 = vst [vmem:[#allocation2 + $0xa0] sm:$0xff] 0.0
          %318 = vst [vmem:[#allocation2 + $0xa8] sm:$0xff] 0.0
          %319 = vst [vmem:[#allocation2 + $0xb0] sm:$0xff] 0.0
          %320 = vst [vmem:[#allocation2 + $0xb8] sm:$0xff] 0.0
          %321 = vst [vmem:[#allocation2 + $0xc0] sm:$0xff] 0.0
          %322 = vst [vmem:[#allocation2 + $0xc8] sm:$0xff] 0.0
          %323 = vst [vmem:[#allocation2 + $0xd0] sm:$0xff] 0.0
          %324 = vst [vmem:[#allocation2 + $0xd8] sm:$0xff] 0.0
          %325 = vst [vmem:[#allocation2 + $0xe0] sm:$0xff] 0.0
          %326 = vst [vmem:[#allocation2 + $0xe8] sm:$0xff] 0.0
          %327 = vst [vmem:[#allocation2 + $0xf0] sm:$0xff] 0.0
          %328 = vst [vmem:[#allocation2 + $0xf8] sm:$0xff] 0.0
        $region40: #{fused_gemm.1} parent=35 // pred_fallthru
          _
        %v329 = vld [vmem:[#allocation2] sm:$0xff]
        %v330 = vld [vmem:[#allocation2 + $0x8] sm:$0xff]
        %v331 = vld [vmem:[#allocation2 + $0x10] sm:$0xff]
        %v332 = vld [vmem:[#allocation2 + $0x18] sm:$0xff]
        %v333 = vld [vmem:[#allocation2 + $0x20] sm:$0xff]
        %v334 = vld [vmem:[#allocation2 + $0x28] sm:$0xff]
        %v335 = vld [vmem:[#allocation2 + $0x30] sm:$0xff]
        %v336 = vld [vmem:[#allocation2 + $0x38] sm:$0xff]
        %v337 = vld [vmem:[#allocation2 + $0x40] sm:$0xff]
        %v338 = vld [vmem:[#allocation2 + $0x48] sm:$0xff]
        %v339 = vld [vmem:[#allocation2 + $0x50] sm:$0xff]
        %v340 = vld [vmem:[#allocation2 + $0x58] sm:$0xff]
        %v341 = vld [vmem:[#allocation2 + $0x60] sm:$0xff]
        %v342 = vld [vmem:[#allocation2 + $0x68] sm:$0xff]
        %v343 = vld [vmem:[#allocation2 + $0x70] sm:$0xff]
        %v344 = vld [vmem:[#allocation2 + $0x78] sm:$0xff]
        %v345 = vld [vmem:[#allocation2 + $0x80] sm:$0xff]
        %v346 = vld [vmem:[#allocation2 + $0x88] sm:$0xff]
        %v347 = vld [vmem:[#allocation2 + $0x90] sm:$0xff]
        %v348 = vld [vmem:[#allocation2 + $0x98] sm:$0xff]
        %v349 = vld [vmem:[#allocation2 + $0xa0] sm:$0xff]
        %v350 = vld [vmem:[#allocation2 + $0xa8] sm:$0xff]
        %v351 = vld [vmem:[#allocation2 + $0xb0] sm:$0xff]
        %v352 = vld [vmem:[#allocation2 + $0xb8] sm:$0xff]
        %v353 = vld [vmem:[#allocation2 + $0xc0] sm:$0xff]
        %v354 = vld [vmem:[#allocation2 + $0xc8] sm:$0xff]
        %v355 = vld [vmem:[#allocation2 + $0xd0] sm:$0xff]
        %v356 = vld [vmem:[#allocation2 + $0xd8] sm:$0xff]
        %v357 = vld [vmem:[#allocation2 + $0xe0] sm:$0xff]
        %v358 = vld [vmem:[#allocation2 + $0xe8] sm:$0xff]
        %v359 = vld [vmem:[#allocation2 + $0xf0] sm:$0xff]
        %v360 = vld [vmem:[#allocation2 + $0xf8] sm:$0xff]
        %v361 = vld [vmem:[%s274] sm:$0xf]
        %v362 = vld [vmem:[%s274 + $0x4] sm:$0xf]
        %v363 = vld [vmem:[%s274 + $0x8] sm:$0xf]
        %v364 = vld [vmem:[%s274 + $0xc] sm:$0xf]
        %v365 = vld [vmem:[%s274 + $0x10] sm:$0xf]
        %v366 = vld [vmem:[%s274 + $0x14] sm:$0xf]
        %v367 = vld [vmem:[%s274 + $0x18] sm:$0xf]
        %v368 = vld [vmem:[%s274 + $0x1c] sm:$0xf]
        %v369 = vld [vmem:[%s274 + $0x20] sm:$0xf]
        %v370 = vld [vmem:[%s274 + $0x24] sm:$0xf]
        %v371 = vld [vmem:[%s274 + $0x28] sm:$0xf]
        %v372 = vld [vmem:[%s274 + $0x2c] sm:$0xf]
        %v373 = vld [vmem:[%s274 + $0x30] sm:$0xf]
        %v374 = vld [vmem:[%s274 + $0x34] sm:$0xf]
        %v375 = vld [vmem:[%s274 + $0x38] sm:$0xf]
        %v376 = vld [vmem:[%s274 + $0x3c] sm:$0xf]
        %v377 = vld [vmem:[%s274 + $0x40] sm:$0xf]
        %v378 = vld [vmem:[%s274 + $0x44] sm:$0xf]
        %v379 = vld [vmem:[%s274 + $0x48] sm:$0xf]
        %v380 = vld [vmem:[%s274 + $0x4c] sm:$0xf]
        %v381 = vld [vmem:[%s274 + $0x50] sm:$0xf]
        %v382 = vld [vmem:[%s274 + $0x54] sm:$0xf]
        %v383 = vld [vmem:[%s274 + $0x58] sm:$0xf]
        %v384 = vld [vmem:[%s274 + $0x5c] sm:$0xf]
        %v385 = vld [vmem:[%s274 + $0x60] sm:$0xf]
        %v386 = vld [vmem:[%s274 + $0x64] sm:$0xf]
        %v387 = vld [vmem:[%s274 + $0x68] sm:$0xf]
        %v388 = vld [vmem:[%s274 + $0x6c] sm:$0xf]
        %v389 = vld [vmem:[%s274 + $0x70] sm:$0xf]
        %v390 = vld [vmem:[%s274 + $0x74] sm:$0xf]
        %v391 = vld [vmem:[%s274 + $0x78] sm:$0xf]
        %v392 = vld [vmem:[%s274 + $0x7c] sm:$0xf]
        %v393 = vld [vmem:[%s283] sm:$0xf]
        %v394 = vld [vmem:[%s283 + $0x4] sm:$0xf]
        %v395 = vld [vmem:[%s283 + $0x8] sm:$0xf]
        %v396 = vld [vmem:[%s283 + $0xc] sm:$0xf]
        %v397 = vld [vmem:[%s283 + $0x10] sm:$0xf]
        %v398 = vld [vmem:[%s283 + $0x14] sm:$0xf]
        %v399 = vld [vmem:[%s283 + $0x18] sm:$0xf]
        %v400 = vld [vmem:[%s283 + $0x1c] sm:$0xf]
        %v401 = vld [vmem:[%s283 + $0x20] sm:$0xf]
        %v402 = vld [vmem:[%s283 + $0x24] sm:$0xf]
        %v403 = vld [vmem:[%s283 + $0x28] sm:$0xf]
        %v404 = vld [vmem:[%s283 + $0x2c] sm:$0xf]
        %v405 = vld [vmem:[%s283 + $0x30] sm:$0xf]
        %v406 = vld [vmem:[%s283 + $0x34] sm:$0xf]
        %v407 = vld [vmem:[%s283 + $0x38] sm:$0xf]
        %v408 = vld [vmem:[%s283 + $0x3c] sm:$0xf]
        %v441 = vunpack.c.l.b16 %v361
        %v442 = vunpack.c.l.b16 %v362
        %v443 = vunpack.c.l.b16 %v363
        %v444 = vunpack.c.l.b16 %v364
        %v445 = vunpack.c.l.b16 %v365
        %v446 = vunpack.c.l.b16 %v366
        %v447 = vunpack.c.l.b16 %v367
        %v448 = vunpack.c.l.b16 %v368
        %v449 = vunpack.c.l.b16 %v369
        %v450 = vunpack.c.l.b16 %v370
        %v451 = vunpack.c.l.b16 %v371
        %v452 = vunpack.c.l.b16 %v372
        %v453 = vunpack.c.l.b16 %v373
        %v454 = vunpack.c.l.b16 %v374
        %v455 = vunpack.c.l.b16 %v375
        %v456 = vunpack.c.l.b16 %v376
        %v457 = vunpack.c.l.b16 %v377
        %v458 = vunpack.c.l.b16 %v378
        %v459 = vunpack.c.l.b16 %v379
        %v460 = vunpack.c.l.b16 %v380
        %v461 = vunpack.c.l.b16 %v381
        %v462 = vunpack.c.l.b16 %v382
        %v463 = vunpack.c.l.b16 %v383
        %v464 = vunpack.c.l.b16 %v384
        %v465 = vunpack.c.l.b16 %v385
        %v466 = vunpack.c.l.b16 %v386
        %v467 = vunpack.c.l.b16 %v387
        %v468 = vunpack.c.l.b16 %v388
        %v469 = vunpack.c.l.b16 %v389
        %v470 = vunpack.c.l.b16 %v390
        %v471 = vunpack.c.l.b16 %v391
        %v472 = vunpack.c.l.b16 %v392
        %v473 = vpack.c.b16 %v442, %v441
        %v474 = vpack.c.b16 %v444, %v443
        %v475 = vpack.c.b16 %v446, %v445
        %v476 = vpack.c.b16 %v448, %v447
        %v477 = vpack.c.b16 %v450, %v449
        %v478 = vpack.c.b16 %v452, %v451
        %v479 = vpack.c.b16 %v454, %v453
        %v480 = vpack.c.b16 %v456, %v455
        %v481 = vpack.c.b16 %v458, %v457
        %v482 = vpack.c.b16 %v460, %v459
        %v483 = vpack.c.b16 %v462, %v461
        %v484 = vpack.c.b16 %v464, %v463
        %v485 = vpack.c.b16 %v466, %v465
        %v486 = vpack.c.b16 %v468, %v467
        %v487 = vpack.c.b16 %v470, %v469
        %v488 = vpack.c.b16 %v472, %v471
        %v521 = vunpack.c.l.b16 %v393
        %v522 = vunpack.c.l.b16 %v394
        %v523 = vunpack.c.l.b16 %v395
        %v524 = vunpack.c.l.b16 %v396
        %v525 = vunpack.c.l.b16 %v397
        %v526 = vunpack.c.l.b16 %v398
        %v527 = vunpack.c.l.b16 %v399
        %v528 = vunpack.c.l.b16 %v400
        %v529 = vunpack.c.l.b16 %v401
        %v530 = vunpack.c.l.b16 %v402
        %v531 = vunpack.c.l.b16 %v403
        %v532 = vunpack.c.l.b16 %v404
        %v533 = vunpack.c.l.b16 %v405
        %v534 = vunpack.c.l.b16 %v406
        %v535 = vunpack.c.l.b16 %v407
        %v536 = vunpack.c.l.b16 %v408
        %v537 = vpack.c.b16 %v522, %v521
        %v538 = vpack.c.b16 %v524, %v523
        %v539 = vpack.c.b16 %v526, %v525
        %v540 = vpack.c.b16 %v528, %v527
        %v541 = vpack.c.b16 %v530, %v529
        %v542 = vpack.c.b16 %v532, %v531
        %v543 = vpack.c.b16 %v534, %v533
        %v544 = vpack.c.b16 %v536, %v535
        %553 = vmatprep.subr.bf16.mxu0 0
        %554 = vmatpush1.bf16.msra.mxu0 %v537
        %555 = vmatprep.subr.bf16.mxu0 0
        %556 = vmatpush1.bf16.msra.mxu0 %v538
        %557 = vmatprep.subr.bf16.mxu0 0
        %558 = vmatpush1.bf16.msra.mxu0 %v539
        %559 = vmatprep.subr.bf16.mxu0 0
        %560 = vmatpush1.bf16.msra.mxu0 %v540
        %561 = vmatprep.subr.bf16.mxu0 0
        %562 = vmatpush1.bf16.msra.mxu0 %v541
        %563 = vmatprep.subr.bf16.mxu0 0
        %564 = vmatpush1.bf16.msra.mxu0 %v542
        %565 = vmatprep.subr.bf16.mxu0 0
        %566 = vmatpush1.bf16.msra.mxu0 %v543
        %567 = vmatprep.subr.bf16.mxu0 0
        %568 = vmatpush1.bf16.msra.mxu0 %v544
        %569 = vmatprep.subr.bf16.mxu0 0
        %570 = vmatpush1.bf16.msra.mxu0 0
        %571 = vmatprep.subr.bf16.mxu0 0
        %572 = vmatpush1.bf16.msra.mxu0 0
        %573 = vmatprep.subr.bf16.mxu0 0
        %574 = vmatpush1.bf16.msra.mxu0 0
        %575 = vmatprep.subr.bf16.mxu0 0
        %576 = vmatpush1.bf16.msra.mxu0 0
        %577 = vmatprep.subr.bf16.mxu0 0
        %578 = vmatpush1.bf16.msra.mxu0 0
        %579 = vmatprep.subr.bf16.mxu0 0
        %580 = vmatpush1.bf16.msra.mxu0 0
        %581 = vmatprep.subr.bf16.mxu0 0
        %582 = vmatpush1.bf16.msra.mxu0 0
        %583 = vmatprep.subr.bf16.mxu0 0
        %584 = vmatpush1.bf16.msra.mxu0 0
        %585 = vmatprep.mubr.bf16.mxu0 0
        %586 = vmatmul.mubr.bf16.gmra.mrb[0].mxu0 %v473
        %v587 = vpop.f32.mrb[0].mxu0
        %v588 = vadd.f32 0.0, %v587
        %v589 = vpop.f32.mrb[0].mxu0
        %v590 = vpop.f32.mrb[0].mxu0
        %v591 = vadd.f32 0.0, %v590
        %v592 = vpop.f32.mrb[0].mxu0
        %593 = vmatprep.mubr.bf16.mxu0 0
        %594 = vmatmul.mubr.bf16.gmra.mrb[0].mxu0 %v474
        %v595 = vpop.f32.mrb[0].mxu0
        %v596 = vadd.f32 0.0, %v595
        %v597 = vpop.f32.mrb[0].mxu0
        %v598 = vpop.f32.mrb[0].mxu0
        %v599 = vadd.f32 0.0, %v598
        %v600 = vpop.f32.mrb[0].mxu0
        %601 = vmatprep.mubr.bf16.mxu0 0
        %602 = vmatmul.mubr.bf16.gmra.mrb[0].mxu0 %v475
        %v603 = vpop.f32.mrb[0].mxu0
        %v604 = vadd.f32 0.0, %v603
        %v605 = vpop.f32.mrb[0].mxu0
        %v606 = vpop.f32.mrb[0].mxu0
        %v607 = vadd.f32 0.0, %v606
        %v608 = vpop.f32.mrb[0].mxu0
        %609 = vmatprep.mubr.bf16.mxu0 0
        %610 = vmatmul.mubr.bf16.gmra.mrb[0].mxu0 %v476
        %v611 = vpop.f32.mrb[0].mxu0
        %v612 = vadd.f32 0.0, %v611
        %v613 = vpop.f32.mrb[0].mxu0
        %v614 = vpop.f32.mrb[0].mxu0
        %v615 = vadd.f32 0.0, %v614
        %v616 = vpop.f32.mrb[0].mxu0
        %617 = vmatprep.mubr.bf16.mxu0 0
        %618 = vmatmul.mubr.bf16.gmra.mrb[0].mxu0 %v477
        %v619 = vpop.f32.mrb[0].mxu0
        %v620 = vadd.f32 0.0, %v619
        %v621 = vpop.f32.mrb[0].mxu0
        %v622 = vpop.f32.mrb[0].mxu0
        %v623 = vadd.f32 0.0, %v622
        %v624 = vpop.f32.mrb[0].mxu0
        %625 = vmatprep.mubr.bf16.mxu0 0
        %626 = vmatmul.mubr.bf16.gmra.mrb[0].mxu0 %v478
        %v627 = vpop.f32.mrb[0].mxu0
        %v628 = vadd.f32 0.0, %v627
        %v629 = vpop.f32.mrb[0].mxu0
        %v630 = vpop.f32.mrb[0].mxu0
        %v631 = vadd.f32 0.0, %v630
        %v632 = vpop.f32.mrb[0].mxu0
        %633 = vmatprep.mubr.bf16.mxu0 0
        %634 = vmatmul.mubr.bf16.gmra.mrb[0].mxu0 %v479
        %v635 = vpop.f32.mrb[0].mxu0
        %v636 = vadd.f32 0.0, %v635
        %v637 = vpop.f32.mrb[0].mxu0
        %v638 = vpop.f32.mrb[0].mxu0
        %v639 = vadd.f32 0.0, %v638
        %v640 = vpop.f32.mrb[0].mxu0
        %641 = vmatprep.mubr.bf16.mxu0 0
        %642 = vmatmul.mubr.bf16.gmra.mrb[0].mxu0 %v480
        %v643 = vpop.f32.mrb[0].mxu0
        %v644 = vadd.f32 0.0, %v643
        %v645 = vpop.f32.mrb[0].mxu0
        %v646 = vpop.f32.mrb[0].mxu0
        %v647 = vadd.f32 0.0, %v646
        %v648 = vpop.f32.mrb[0].mxu0
        %649 = vmatprep.mubr.bf16.mxu0 0
        %650 = vmatmul.mubr.bf16.gmra.mrb[0].mxu0 %v481
        %v651 = vpop.f32.mrb[0].mxu0
        %v652 = vadd.f32 0.0, %v651
        %v653 = vpop.f32.mrb[0].mxu0
        %v654 = vpop.f32.mrb[0].mxu0
        %v655 = vadd.f32 0.0, %v654
        %v656 = vpop.f32.mrb[0].mxu0
        %657 = vmatprep.mubr.bf16.mxu0 0
        %658 = vmatmul.mubr.bf16.gmra.mrb[0].mxu0 %v482
        %v659 = vpop.f32.mrb[0].mxu0
        %v660 = vadd.f32 0.0, %v659
        %v661 = vpop.f32.mrb[0].mxu0
        %v662 = vpop.f32.mrb[0].mxu0
        %v663 = vadd.f32 0.0, %v662
        %v664 = vpop.f32.mrb[0].mxu0
        %665 = vmatprep.mubr.bf16.mxu0 0
        %666 = vmatmul.mubr.bf16.gmra.mrb[0].mxu0 %v483
        %v667 = vpop.f32.mrb[0].mxu0
        %v668 = vadd.f32 0.0, %v667
        %v669 = vpop.f32.mrb[0].mxu0
        %v670 = vpop.f32.mrb[0].mxu0
        %v671 = vadd.f32 0.0, %v670
        %v672 = vpop.f32.mrb[0].mxu0
        %673 = vmatprep.mubr.bf16.mxu0 0
        %674 = vmatmul.mubr.bf16.gmra.mrb[0].mxu0 %v484
        %v675 = vpop.f32.mrb[0].mxu0
        %v676 = vadd.f32 0.0, %v675
        %v677 = vpop.f32.mrb[0].mxu0
        %v678 = vpop.f32.mrb[0].mxu0
        %v679 = vadd.f32 0.0, %v678
        %v680 = vpop.f32.mrb[0].mxu0
        %681 = vmatprep.mubr.bf16.mxu0 0
        %682 = vmatmul.mubr.bf16.gmra.mrb[0].mxu0 %v485
        %v683 = vpop.f32.mrb[0].mxu0
        %v684 = vadd.f32 0.0, %v683
        %v685 = vpop.f32.mrb[0].mxu0
        %v686 = vpop.f32.mrb[0].mxu0
        %v687 = vadd.f32 0.0, %v686
        %v688 = vpop.f32.mrb[0].mxu0
        %689 = vmatprep.mubr.bf16.mxu0 0
        %690 = vmatmul.mubr.bf16.gmra.mrb[0].mxu0 %v486
        %v691 = vpop.f32.mrb[0].mxu0
        %v692 = vadd.f32 0.0, %v691
        %v693 = vpop.f32.mrb[0].mxu0
        %v694 = vpop.f32.mrb[0].mxu0
        %v695 = vadd.f32 0.0, %v694
        %v696 = vpop.f32.mrb[0].mxu0
        %697 = vmatprep.mubr.bf16.mxu0 0
        %698 = vmatmul.mubr.bf16.gmra.mrb[0].mxu0 %v487
        %v699 = vpop.f32.mrb[0].mxu0
        %v700 = vadd.f32 0.0, %v699
        %v701 = vpop.f32.mrb[0].mxu0
        %v702 = vpop.f32.mrb[0].mxu0
        %v703 = vadd.f32 0.0, %v702
        %v704 = vpop.f32.mrb[0].mxu0
        %705 = vmatprep.mubr.bf16.mxu0 0
        %706 = vmatmul.mubr.bf16.gmra.mrb[0].mxu0 %v488
        %v707 = vpop.f32.mrb[0].mxu0
        %v708 = vadd.f32 0.0, %v707
        %v709 = vpop.f32.mrb[0].mxu0
        %v710 = vpop.f32.mrb[0].mxu0
        %v711 = vadd.f32 0.0, %v710
        %v712 = vpop.f32.mrb[0].mxu0
        %713 = vdwg.mxu0
        %v714 = vadd.f32 %v329, %v588
        %v715 = vadd.f32 %v330, %v591
        %v716 = vadd.f32 %v331, %v596
        %v717 = vadd.f32 %v332, %v599
        %v718 = vadd.f32 %v333, %v604
        %v719 = vadd.f32 %v334, %v607
        %v720 = vadd.f32 %v335, %v612
        %v721 = vadd.f32 %v336, %v615
        %v722 = vadd.f32 %v337, %v620
        %v723 = vadd.f32 %v338, %v623
        %v724 = vadd.f32 %v339, %v628
        %v725 = vadd.f32 %v340, %v631
        %v726 = vadd.f32 %v341, %v636
        %v727 = vadd.f32 %v342, %v639
        %v728 = vadd.f32 %v343, %v644
        %v729 = vadd.f32 %v344, %v647
        %v730 = vadd.f32 %v345, %v652
        %v731 = vadd.f32 %v346, %v655
        %v732 = vadd.f32 %v347, %v660
        %v733 = vadd.f32 %v348, %v663
        %v734 = vadd.f32 %v349, %v668
        %v735 = vadd.f32 %v350, %v671
        %v736 = vadd.f32 %v351, %v676
        %v737 = vadd.f32 %v352, %v679
        %v738 = vadd.f32 %v353, %v684
        %v739 = vadd.f32 %v354, %v687
        %v740 = vadd.f32 %v355, %v692
        %v741 = vadd.f32 %v356, %v695
        %v742 = vadd.f32 %v357, %v700
        %v743 = vadd.f32 %v358, %v703
        %v744 = vadd.f32 %v359, %v708
        %v745 = vadd.f32 %v360, %v711
        %746 = vst [vmem:[#allocation2] sm:$0xff] %v714
        %747 = vst [vmem:[#allocation2 + $0x8] sm:$0xff] %v715
        %748 = vst [vmem:[#allocation2 + $0x10] sm:$0xff] %v716
        %749 = vst [vmem:[#allocation2 + $0x18] sm:$0xff] %v717
        %750 = vst [vmem:[#allocation2 + $0x20] sm:$0xff] %v718
        %751 = vst [vmem:[#allocation2 + $0x28] sm:$0xff] %v719
        %752 = vst [vmem:[#allocation2 + $0x30] sm:$0xff] %v720
        %753 = vst [vmem:[#allocation2 + $0x38] sm:$0xff] %v721
        %754 = vst [vmem:[#allocation2 + $0x40] sm:$0xff] %v722
        %755 = vst [vmem:[#allocation2 + $0x48] sm:$0xff] %v723
        %756 = vst [vmem:[#allocation2 + $0x50] sm:$0xff] %v724
        %757 = vst [vmem:[#allocation2 + $0x58] sm:$0xff] %v725
        %758 = vst [vmem:[#allocation2 + $0x60] sm:$0xff] %v726
        %759 = vst [vmem:[#allocation2 + $0x68] sm:$0xff] %v727
        %760 = vst [vmem:[#allocation2 + $0x70] sm:$0xff] %v728
        %761 = vst [vmem:[#allocation2 + $0x78] sm:$0xff] %v729
        %762 = vst [vmem:[#allocation2 + $0x80] sm:$0xff] %v730
        %763 = vst [vmem:[#allocation2 + $0x88] sm:$0xff] %v731
        %764 = vst [vmem:[#allocation2 + $0x90] sm:$0xff] %v732
        %765 = vst [vmem:[#allocation2 + $0x98] sm:$0xff] %v733
        %766 = vst [vmem:[#allocation2 + $0xa0] sm:$0xff] %v734
        %767 = vst [vmem:[#allocation2 + $0xa8] sm:$0xff] %v735
        %768 = vst [vmem:[#allocation2 + $0xb0] sm:$0xff] %v736
        %769 = vst [vmem:[#allocation2 + $0xb8] sm:$0xff] %v737
        %770 = vst [vmem:[#allocation2 + $0xc0] sm:$0xff] %v738
        %771 = vst [vmem:[#allocation2 + $0xc8] sm:$0xff] %v739
        %772 = vst [vmem:[#allocation2 + $0xd0] sm:$0xff] %v740
        %773 = vst [vmem:[#allocation2 + $0xd8] sm:$0xff] %v741
        %774 = vst [vmem:[#allocation2 + $0xe0] sm:$0xff] %v742
        %775 = vst [vmem:[#allocation2 + $0xe8] sm:$0xff] %v743
        %776 = vst [vmem:[#allocation2 + $0xf0] sm:$0xff] %v744
        %777 = vst [vmem:[#allocation2 + $0xf8] sm:$0xff] %v745
        // Predicated region
        $region41: #{fused_gemm.1} parent=35 // pred_check
          %p778 = pneg %p293
        $region42: #{fused_gemm.1} parent=35 // pred_check_branch
          %780 = sbr.rel (%p778) target = $region44
        $region43: #{fused_gemm.1} parent=35 // pred_region
          %v781 = vld [vmem:[#allocation2] sm:$0xff]
          %v782 = vld [vmem:[#allocation2 + $0x8] sm:$0xff]
          %v783 = vld [vmem:[#allocation2 + $0x10] sm:$0xff]
          %v784 = vld [vmem:[#allocation2 + $0x18] sm:$0xff]
          %v785 = vld [vmem:[#allocation2 + $0x20] sm:$0xff]
          %v786 = vld [vmem:[#allocation2 + $0x28] sm:$0xff]
          %v787 = vld [vmem:[#allocation2 + $0x30] sm:$0xff]
          %v788 = vld [vmem:[#allocation2 + $0x38] sm:$0xff]
          %v789 = vld [vmem:[#allocation2 + $0x40] sm:$0xff]
          %v790 = vld [vmem:[#allocation2 + $0x48] sm:$0xff]
          %v791 = vld [vmem:[#allocation2 + $0x50] sm:$0xff]
          %v792 = vld [vmem:[#allocation2 + $0x58] sm:$0xff]
          %v793 = vld [vmem:[#allocation2 + $0x60] sm:$0xff]
          %v794 = vld [vmem:[#allocation2 + $0x68] sm:$0xff]
          %v795 = vld [vmem:[#allocation2 + $0x70] sm:$0xff]
          %v796 = vld [vmem:[#allocation2 + $0x78] sm:$0xff]
          %v797 = vld [vmem:[#allocation2 + $0x80] sm:$0xff]
          %v798 = vld [vmem:[#allocation2 + $0x88] sm:$0xff]
          %v799 = vld [vmem:[#allocation2 + $0x90] sm:$0xff]
          %v800 = vld [vmem:[#allocation2 + $0x98] sm:$0xff]
          %v801 = vld [vmem:[#allocation2 + $0xa0] sm:$0xff]
          %v802 = vld [vmem:[#allocation2 + $0xa8] sm:$0xff]
          %v803 = vld [vmem:[#allocation2 + $0xb0] sm:$0xff]
          %v804 = vld [vmem:[#allocation2 + $0xb8] sm:$0xff]
          %v805 = vld [vmem:[#allocation2 + $0xc0] sm:$0xff]
          %v806 = vld [vmem:[#allocation2 + $0xc8] sm:$0xff]
          %v807 = vld [vmem:[#allocation2 + $0xd0] sm:$0xff]
          %v808 = vld [vmem:[#allocation2 + $0xd8] sm:$0xff]
          %v809 = vld [vmem:[#allocation2 + $0xe0] sm:$0xff]
          %v810 = vld [vmem:[#allocation2 + $0xe8] sm:$0xff]
          %v811 = vld [vmem:[#allocation2 + $0xf0] sm:$0xff]
          %v812 = vld [vmem:[#allocation2 + $0xf8] sm:$0xff]
          %v813 = vld [vmem:[%s287] sm:$0x1]
          %v815 = vlaneseq
          %v816 = vshrl.u32 %v815, 7
          %v817 = vsub.s32 0, %v816
          %v818 = vrot.slane %v813, %v817
          %v820 = vmul.f32 %v781, %v818
          %v821 = vmul.f32 %v782, %v818
          %v822 = vmul.f32 %v783, %v818
          %v823 = vmul.f32 %v784, %v818
          %v824 = vmul.f32 %v785, %v818
          %v825 = vmul.f32 %v786, %v818
          %v826 = vmul.f32 %v787, %v818
          %v827 = vmul.f32 %v788, %v818
          %v828 = vmul.f32 %v789, %v818
          %v829 = vmul.f32 %v790, %v818
          %v830 = vmul.f32 %v791, %v818
          %v831 = vmul.f32 %v792, %v818
          %v832 = vmul.f32 %v793, %v818
          %v833 = vmul.f32 %v794, %v818
          %v834 = vmul.f32 %v795, %v818
          %v835 = vmul.f32 %v796, %v818
          %v836 = vmul.f32 %v797, %v818
          %v837 = vmul.f32 %v798, %v818
          %v838 = vmul.f32 %v799, %v818
          %v839 = vmul.f32 %v800, %v818
          %v840 = vmul.f32 %v801, %v818
          %v841 = vmul.f32 %v802, %v818
          %v842 = vmul.f32 %v803, %v818
          %v843 = vmul.f32 %v804, %v818
          %v844 = vmul.f32 %v805, %v818
          %v845 = vmul.f32 %v806, %v818
          %v846 = vmul.f32 %v807, %v818
          %v847 = vmul.f32 %v808, %v818
          %v848 = vmul.f32 %v809, %v818
          %v849 = vmul.f32 %v810, %v818
          %v850 = vmul.f32 %v811, %v818
          %v851 = vmul.f32 %v812, %v818
          %v852 = vld [vmem:[%s290] sm:$0x1]
          %v854 = vlaneseq
          %v855 = vshrl.u32 %v854, 7
          %v856 = vsub.s32 0, %v855
          %v857 = vrot.slane %v852, %v856
          %v859 = vadd.f32 %v820, %v857
          %v860 = vadd.f32 %v821, %v857
          %v861 = vadd.f32 %v822, %v857
          %v862 = vadd.f32 %v823, %v857
          %v863 = vadd.f32 %v824, %v857
          %v864 = vadd.f32 %v825, %v857
          %v865 = vadd.f32 %v826, %v857
          %v866 = vadd.f32 %v827, %v857
          %v867 = vadd.f32 %v828, %v857
          %v868 = vadd.f32 %v829, %v857
          %v869 = vadd.f32 %v830, %v857
          %v870 = vadd.f32 %v831, %v857
          %v871 = vadd.f32 %v832, %v857
          %v872 = vadd.f32 %v833, %v857
          %v873 = vadd.f32 %v834, %v857
          %v874 = vadd.f32 %v835, %v857
          %v875 = vadd.f32 %v836, %v857
          %v876 = vadd.f32 %v837, %v857
          %v877 = vadd.f32 %v838, %v857
          %v878 = vadd.f32 %v839, %v857
          %v879 = vadd.f32 %v840, %v857
          %v880 = vadd.f32 %v841, %v857
          %v881 = vadd.f32 %v842, %v857
          %v882 = vadd.f32 %v843, %v857
          %v883 = vadd.f32 %v844, %v857
          %v884 = vadd.f32 %v845, %v857
          %v885 = vadd.f32 %v846, %v857
          %v886 = vadd.f32 %v847, %v857
          %v887 = vadd.f32 %v848, %v857
          %v888 = vadd.f32 %v849, %v857
          %v889 = vadd.f32 %v850, %v857
          %v890 = vadd.f32 %v851, %v857
          %v891 = vmax.f32 %v859, 0.0
          %v892 = vmax.f32 %v860, 0.0
          %v893 = vmax.f32 %v861, 0.0
          %v894 = vmax.f32 %v862, 0.0
          %v895 = vmax.f32 %v863, 0.0
          %v896 = vmax.f32 %v864, 0.0
          %v897 = vmax.f32 %v865, 0.0
          %v898 = vmax.f32 %v866, 0.0
          %v899 = vmax.f32 %v867, 0.0
          %v900 = vmax.f32 %v868, 0.0
          %v901 = vmax.f32 %v869, 0.0
          %v902 = vmax.f32 %v870, 0.0
          %v903 = vmax.f32 %v871, 0.0
          %v904 = vmax.f32 %v872, 0.0
          %v905 = vmax.f32 %v873, 0.0
          %v906 = vmax.f32 %v874, 0.0
          %v907 = vmax.f32 %v875, 0.0
          %v908 = vmax.f32 %v876, 0.0
          %v909 = vmax.f32 %v877, 0.0
          %v910 = vmax.f32 %v878, 0.0
          %v911 = vmax.f32 %v879, 0.0
          %v912 = vmax.f32 %v880, 0.0
          %v913 = vmax.f32 %v881, 0.0
          %v914 = vmax.f32 %v882, 0.0
          %v915 = vmax.f32 %v883, 0.0
          %v916 = vmax.f32 %v884, 0.0
          %v917 = vmax.f32 %v885, 0.0
          %v918 = vmax.f32 %v886, 0.0
          %v919 = vmax.f32 %v887, 0.0
          %v920 = vmax.f32 %v888, 0.0
          %v921 = vmax.f32 %v889, 0.0
          %v922 = vmax.f32 %v890, 0.0
          %v923 = vpack.c.bf16 %v892, %v891
          %v924 = vpack.c.bf16 %v894, %v893
          %v925 = vpack.c.bf16 %v896, %v895
          %v926 = vpack.c.bf16 %v898, %v897
          %v927 = vpack.c.bf16 %v900, %v899
          %v928 = vpack.c.bf16 %v902, %v901
          %v929 = vpack.c.bf16 %v904, %v903
          %v930 = vpack.c.bf16 %v906, %v905
          %v931 = vpack.c.bf16 %v908, %v907
          %v932 = vpack.c.bf16 %v910, %v909
          %v933 = vpack.c.bf16 %v912, %v911
          %v934 = vpack.c.bf16 %v914, %v913
          %v935 = vpack.c.bf16 %v916, %v915
          %v936 = vpack.c.bf16 %v918, %v917
          %v937 = vpack.c.bf16 %v920, %v919
          %v938 = vpack.c.bf16 %v922, %v921
          %v955 = vunpack.c.l.b16 %v923
          %v956 = vunpack.c.h.b16 %v923
          %v957 = vunpack.c.l.b16 %v924
          %v958 = vunpack.c.h.b16 %v924
          %v959 = vunpack.c.l.b16 %v925
          %v960 = vunpack.c.h.b16 %v925
          %v961 = vunpack.c.l.b16 %v926
          %v962 = vunpack.c.h.b16 %v926
          %v963 = vunpack.c.l.b16 %v927
          %v964 = vunpack.c.h.b16 %v927
          %v965 = vunpack.c.l.b16 %v928
          %v966 = vunpack.c.h.b16 %v928
          %v967 = vunpack.c.l.b16 %v929
          %v968 = vunpack.c.h.b16 %v929
          %v969 = vunpack.c.l.b16 %v930
          %v970 = vunpack.c.h.b16 %v930
          %v971 = vunpack.c.l.b16 %v931
          %v972 = vunpack.c.h.b16 %v931
          %v973 = vunpack.c.l.b16 %v932
          %v974 = vunpack.c.h.b16 %v932
          %v975 = vunpack.c.l.b16 %v933
          %v976 = vunpack.c.h.b16 %v933
          %v977 = vunpack.c.l.b16 %v934
          %v978 = vunpack.c.h.b16 %v934
          %v979 = vunpack.c.l.b16 %v935
          %v980 = vunpack.c.h.b16 %v935
          %v981 = vunpack.c.l.b16 %v936
          %v982 = vunpack.c.h.b16 %v936
          %v983 = vunpack.c.l.b16 %v937
          %v984 = vunpack.c.h.b16 %v937
          %v985 = vunpack.c.l.b16 %v938
          %v986 = vunpack.c.h.b16 %v938
          %v987 = vpack.c.b16 %v955, %v955
          %v988 = vpack.c.b16 %v956, %v956
          %v989 = vpack.c.b16 %v957, %v957
          %v990 = vpack.c.b16 %v958, %v958
          %v991 = vpack.c.b16 %v959, %v959
          %v992 = vpack.c.b16 %v960, %v960
          %v993 = vpack.c.b16 %v961, %v961
          %v994 = vpack.c.b16 %v962, %v962
          %v995 = vpack.c.b16 %v963, %v963
          %v996 = vpack.c.b16 %v964, %v964
          %v997 = vpack.c.b16 %v965, %v965
          %v998 = vpack.c.b16 %v966, %v966
          %v999 = vpack.c.b16 %v967, %v967
          %v1000 = vpack.c.b16 %v968, %v968
          %v1001 = vpack.c.b16 %v969, %v969
          %v1002 = vpack.c.b16 %v970, %v970
          %v1003 = vpack.c.b16 %v971, %v971
          %v1004 = vpack.c.b16 %v972, %v972
          %v1005 = vpack.c.b16 %v973, %v973
          %v1006 = vpack.c.b16 %v974, %v974
          %v1007 = vpack.c.b16 %v975, %v975
          %v1008 = vpack.c.b16 %v976, %v976
          %v1009 = vpack.c.b16 %v977, %v977
          %v1010 = vpack.c.b16 %v978, %v978
          %v1011 = vpack.c.b16 %v979, %v979
          %v1012 = vpack.c.b16 %v980, %v980
          %v1013 = vpack.c.b16 %v981, %v981
          %v1014 = vpack.c.b16 %v982, %v982
          %v1015 = vpack.c.b16 %v983, %v983
          %v1016 = vpack.c.b16 %v984, %v984
          %v1017 = vpack.c.b16 %v985, %v985
          %v1018 = vpack.c.b16 %v986, %v986
          %1051 = vst [vmem:[%s266] sm:$0xf] %v987
          %1052 = vst [vmem:[%s266 + $0x4] sm:$0xf] %v988
          %1053 = vst [vmem:[%s266 + $0x8] sm:$0xf] %v989
          %1054 = vst [vmem:[%s266 + $0xc] sm:$0xf] %v990
          %1055 = vst [vmem:[%s266 + $0x10] sm:$0xf] %v991
          %1056 = vst [vmem:[%s266 + $0x14] sm:$0xf] %v992
          %1057 = vst [vmem:[%s266 + $0x18] sm:$0xf] %v993
          %1058 = vst [vmem:[%s266 + $0x1c] sm:$0xf] %v994
          %1059 = vst [vmem:[%s266 + $0x20] sm:$0xf] %v995
          %1060 = vst [vmem:[%s266 + $0x24] sm:$0xf] %v996
          %1061 = vst [vmem:[%s266 + $0x28] sm:$0xf] %v997
          %1062 = vst [vmem:[%s266 + $0x2c] sm:$0xf] %v998
          %1063 = vst [vmem:[%s266 + $0x30] sm:$0xf] %v999
          %1064 = vst [vmem:[%s266 + $0x34] sm:$0xf] %v1000
          %1065 = vst [vmem:[%s266 + $0x38] sm:$0xf] %v1001
          %1066 = vst [vmem:[%s266 + $0x3c] sm:$0xf] %v1002
          %1067 = vst [vmem:[%s266 + $0x40] sm:$0xf] %v1003
          %1068 = vst [vmem:[%s266 + $0x44] sm:$0xf] %v1004
          %1069 = vst [vmem:[%s266 + $0x48] sm:$0xf] %v1005
          %1070 = vst [vmem:[%s266 + $0x4c] sm:$0xf] %v1006
          %1071 = vst [vmem:[%s266 + $0x50] sm:$0xf] %v1007
          %1072 = vst [vmem:[%s266 + $0x54] sm:$0xf] %v1008
          %1073 = vst [vmem:[%s266 + $0x58] sm:$0xf] %v1009
          %1074 = vst [vmem:[%s266 + $0x5c] sm:$0xf] %v1010
          %1075 = vst [vmem:[%s266 + $0x60] sm:$0xf] %v1011
          %1076 = vst [vmem:[%s266 + $0x64] sm:$0xf] %v1012
          %1077 = vst [vmem:[%s266 + $0x68] sm:$0xf] %v1013
          %1078 = vst [vmem:[%s266 + $0x6c] sm:$0xf] %v1014
          %1079 = vst [vmem:[%s266 + $0x70] sm:$0xf] %v1015
          %1080 = vst [vmem:[%s266 + $0x74] sm:$0xf] %v1016
          %1081 = vst [vmem:[%s266 + $0x78] sm:$0xf] %v1017
          %1082 = vst [vmem:[%s266 + $0x7c] sm:$0xf] %v1018
        $region44: #{fused_gemm.1} parent=35 // pred_fallthru
          _
        %s1083 = sand.u32 %s155, 1
        %s1084 = scalar_lea.sflag [#allocation4], %s1083
        %s1085 = sand.u32 %s155, 1
        %s1086 = smul.addr %s1085, 128
        %s1087 = scalar_lea.vmem [#allocation3], %s1086
        // Predicated region
        $region45: #{fused_gemm.1} parent=35 // pred_check
          %p1088 = pneg %p165
        $region46: #{fused_gemm.1} parent=35 // pred_check_branch
          %1090 = sbr.rel (%p1088) target = $region48
        $region47: #{fused_gemm.1} parent=35 // pred_region
          %s1091 = smul.u32 32, %s23
          %s1093 = ssub.s32 2048, 2048
          %1094 = vsyncadd %s1084, %s1093
          %s1095 = sadd.s32 %s24, %s1091
          %s1096 = smul.addr %s1095, 64
          %s1097 = scalar_lea.hbm %s4, %s1096
          %s1098 = sshll.u32 %s1087, 4
          %s1099 = int_to_ptr.vmem [resolvable:$true] %s1098
          %1104 = dma.vmem_to_hbm [thread:$0]  %s1099, 2048, %s1097, %s1084, 64, 64, 4
        $region48: #{fused_gemm.1} parent=35 // pred_fallthru
          _
      $region36: #{fused_gemm.1} parent=5 // pred_fallthru
        _
      %p1105 = scmp.le.s32.totalorder 2, %s13
      // Predicated region
      $region49: #{fused_gemm.1} parent=5 // pred_check
        %p1106 = pneg %p1105
      $region50: #{fused_gemm.1} parent=5 // pred_check_branch
        %1108 = sbr.rel (%p1106) target = $region52
      $region51: #{fused_gemm.1} parent=5 // pred_region
        %s1109 = ssub.s32 %s13, 2
        // Predicated region
        $region53: #{fused_gemm.1} parent=51 // pred_check
          %p1110 = pneg %p171
        $region54: #{fused_gemm.1} parent=51 // pred_check_branch
          %1112 = sbr.rel (%p1110) target = $region56
        $region55: #{fused_gemm.1} parent=51 // pred_region
          %s1113 = sand.u32 %s156, 1
          %s1114 = scalar_lea.sflag [#allocation4], %s1113
          %s1115 = sand.u32 %s156, 1
          %s1116 = smul.addr %s1115, 128
          %s1117 = scalar_lea.vmem [#allocation3], %s1116
          %1118 = dma.done %s1114, 2048
        $region56: #{fused_gemm.1} parent=51 // pred_fallthru
          _
      $region52: #{fused_gemm.1} parent=5 // pred_fallthru
        _
    $region6: #{fused_gemm.1} parent=1 // loop_footer
      %s17 = sadd.s32 1, %s13
    $region7: #{fused_gemm.1} parent=1 // loop_footer_branch
      %12 = sbr.rel target = $region3
    $region8: #{fused_gemm.1} parent=1 // loop_exit
      _
    %1119 = vsyncpa [#allocation4], 1
    %s1120 = scalar_lea.sflag [#allocation4], 1
    %1121 = vsyncpa %s1120, 1

</llo_original>
